<compile_context>
chip_gen: v7x
topology: tpu7x:2x2x1
jax: 0.10.0
libtpu: 0.0.40
codegen_flags: <defaults>
</compile_context>

<pallas_src>
import jax
import jax.numpy as jnp
from jax.experimental import pallas as pl
from jax.experimental.pallas import tpu as pltpu

NUM_MOTIFS = 13


def _round_up(x, m):
    return (x + m - 1) // m * m


# ----------------------------------------------------------------------------
# Prologue kernel: h = (A0 @ x) @ W + x @ root + b   (row-tiled)
# ----------------------------------------------------------------------------
def _gcn_linear_kernel(a0_ref, x_ref, xt_ref, w_ref, r_ref, b_ref, h_ref, hb_ref):
    ax = jnp.dot(a0_ref[...], x_ref[...], preferred_element_type=jnp.float32)
    h = (jnp.dot(ax, w_ref[...], preferred_element_type=jnp.float32)
         + jnp.dot(xt_ref[...], r_ref[...], preferred_element_type=jnp.float32)
         + b_ref[...])
    h_ref[...] = h
    hb_ref[...] = h.astype(jnp.bfloat16)


# ----------------------------------------------------------------------------
# Main kernel: one (row tile, motif) step of propagation + fused compress/att
# ----------------------------------------------------------------------------
def _motif_kernel(a_ref, hbf_ref, hfp_ref, wc_ref, wh_ref, brow_ref, s_ref, st_ref,
                  o_ref, acc_ref):
    k = pl.program_id(1)
    d13 = s_ref.shape[0]             # 13 * D
    half = acc_ref.shape[1] // 2     # lane-aligned half width (>= d13)

    @pl.when(k == 0)
    def _init():
        # rep-0 (h) contribution to every motif's compress + both bias rows.
        acc_ref[...] = brow_ref[...] + jnp.dot(
            hfp_ref[...], wh_ref[...], preferred_element_type=jnp.float32)

    # Motif propagation for rep k+1, this row tile: bf16 MXU, f32 accumulate.
    m = jnp.dot(a_ref[...], hbf_ref[...], preferred_element_type=jnp.float32)
    # This motif's contribution to [c_all | mw_all] for ALL 13 output blocks.
    acc_ref[...] += jnp.dot(m, wc_ref[...], preferred_element_type=jnp.float32)

    @pl.when(k == NUM_MOTIFS - 1)
    def _epilogue():
        c_all = acc_ref[:, 0:d13]                  # (TM, 13D)
        mw_all = acc_ref[:, half:half + d13]       # (TM, 13D)
        # per-motif D-column reduction via selector matmul, then sigmoid
        att = jax.nn.sigmoid(jnp.dot(mw_all * c_all, s_ref[...],
                                     preferred_element_type=jnp.float32))
        # broadcast each att value back over its D-wide block
        att_b = jnp.dot(att, st_ref[...], preferred_element_type=jnp.float32)
        # TODO(synk): motif_dropout / att_dropout are training-only; identity here.
        o_ref[...] = att_b * (mw_all - c_all)


# ----------------------------------------------------------------------------
# Host-side parameter re-layout (done once, trace-time / cacheable)
# ----------------------------------------------------------------------------
def _prepare_fused_weights(params):
    c = params["weight"].shape[1]     # out_channels
    d = params["wa"].shape[1]
    k = NUM_MOTIFS
    d13 = k * d
    half = _round_up(d13, 128)        # lane-aligned half width

    # W_big: (14*C, 13*D).  Column block mi holds motif_w[mi] rows placed at
    # the leave-one-out positions (zero block at the excluded rep mi+1).
    zero_blk = jnp.zeros((c, d), jnp.float32)
    cols = []
    for mi in range(k):
        blocks = list(jnp.split(params["motif_w"][mi], k, axis=0))   # 13 x (C, D)
        cols.append(jnp.concatenate(blocks[:mi + 1] + [zero_blk] + blocks[mi + 1:],
                                    axis=0))                         # (14*C, D... stacked)
    w_big = jnp.concatenate(cols, axis=1)                            # (14*C, 13*D)

    def pad_cols(mat):                 # (rows, 13D) -> (rows, half)
        return jnp.pad(mat, ((0, 0), (0, half - d13)))

    # Per-motif combined projection: WC[k] = [ compress rows for rep k+1 | wa at block k ]
    wa = params["wa"]
    wc_blocks = []
    for kk in range(k):
        c_part = w_big[(kk + 1) * c:(kk + 2) * c, :]                 # (C, 13D)
        mw_part = jnp.zeros((c, d13), jnp.float32).at[:, kk * d:(kk + 1) * d].set(wa)
        wc_blocks.append(jnp.concatenate([pad_cols(c_part), pad_cols(mw_part)], axis=1))
    wc = jnp.stack(wc_blocks)                                        # (13, C, 2*half)

    # rep-0 (h) contribution + bias rows, added once at k == 0.
    wh = jnp.concatenate([pad_cols(w_big[0:c, :]),
                          jnp.zeros((c, half), jnp.float32)], axis=1)   # (C, 2*half)
    brow = jnp.concatenate([pad_cols(params["motif_b"].reshape(1, d13)),
                            pad_cols(jnp.tile(params["ba"], k).reshape(1, d13))],
                           axis=1)                                   # (1, 2*half)

    # Selector matrices for the per-motif D-column reduce / broadcast.
    s = jnp.kron(jnp.eye(k, dtype=jnp.float32), jnp.ones((d, 1), jnp.float32))   # (13D, 13)
    st = jnp.kron(jnp.eye(k, dtype=jnp.float32), jnp.ones((1, d), jnp.float32))  # (13, 13D)
    return wc, wh, brow, s, st


# ----------------------------------------------------------------------------
# Full forward
# ----------------------------------------------------------------------------
def motif_conv_forward(params, a0, a_motifs, x, *, tm=128):
    n, c_in = x.shape
    c_out = params["weight"].shape[1]
    d = params["wa"].shape[1]
    d13 = NUM_MOTIFS * d
    assert n % tm == 0, "row tile must divide N"  # TODO(synk): pad for general N

    wc, wh, brow, s, st = _prepare_fused_weights(params)
    half = wc.shape[-1] // 2
    num_tiles = n // tm
    vmem_limit = 64 * 1024 * 1024

    # --- Prologue: h (f32) and its bf16 copy for the motif propagation ---
    h, h_bf = pl.pallas_call(
        _gcn_linear_kernel,
        out_shape=(jax.ShapeDtypeStruct((n, c_out), jnp.float32),
                   jax.ShapeDtypeStruct((n, c_out), jnp.bfloat16)),
        grid=(num_tiles,),
        in_specs=[pl.BlockSpec((tm, n), lambda i: (i, 0)),       # A0 row tile
                  pl.BlockSpec((n, c_in), lambda i: (0, 0)),     # x (full, resident)
                  pl.BlockSpec((tm, c_in), lambda i: (i, 0)),    # x row tile (root term)
                  pl.BlockSpec((c_in, c_out), lambda i: (0, 0)),
                  pl.BlockSpec((c_in, c_out), lambda i: (0, 0)),
                  pl.BlockSpec((1, c_out), lambda i: (0, 0))],
        out_specs=(pl.BlockSpec((tm, c_out), lambda i: (i, 0)),
                   pl.BlockSpec((tm, c_out), lambda i: (i, 0))),
        compiler_params=pltpu.CompilerParams(
            dimension_semantics=("parallel",),
            vmem_limit_bytes=vmem_limit),
    )(a0, x, x, params["weight"], params["root"], params["bias"].reshape(1, c_out))

    # --- Main: 13 motif propagations + leave-one-out compress + attention ---
    a_bf = a_motifs.astype(jnp.bfloat16)    # carry adjacencies in bf16 (HBM-bound read)

    out = pl.pallas_call(
        _motif_kernel,
        out_shape=jax.ShapeDtypeStruct((n, d13), jnp.float32),
        grid=(num_tiles, NUM_MOTIFS),
        in_specs=[
            pl.BlockSpec((pl.Squeezed(), tm, n), lambda i, k: (k, i, 0)),   # A_k row tile
            pl.BlockSpec((n, c_out), lambda i, k: (0, 0)),                  # h bf16 (resident)
            pl.BlockSpec((tm, c_out), lambda i, k: (i, 0)),                 # h f32 row tile
            pl.BlockSpec((pl.Squeezed(), c_out, 2 * half), lambda i, k: (k, 0, 0)),  # WC_k
            pl.BlockSpec((c_out, 2 * half), lambda i, k: (0, 0)),           # WH
            pl.BlockSpec((1, 2 * half), lambda i, k: (0, 0)),               # bias row
            pl.BlockSpec((d13, NUM_MOTIFS), lambda i, k: (0, 0)),           # reduce selector
            pl.BlockSpec((NUM_MOTIFS, d13), lambda i, k: (0, 0)),           # broadcast selector
        ],
        out_specs=pl.BlockSpec((tm, d13), lambda i, k: (i, 0)),
        scratch_shapes=[pltpu.VMEM((tm, 2 * half), jnp.float32)],
        compiler_params=pltpu.CompilerParams(
            dimension_semantics=("parallel", "arbitrary"),
            vmem_limit_bytes=vmem_limit),
    )(a_bf, h_bf, h, wc, wh, brow, s, st)
    return out


# ----------------------------------------------------------------------------
# Pure-JAX reference (for validation)
# ----------------------------------------------------------------------------
def motif_conv_reference(params, a0, a_motifs, x, *, bf16_propagation=False):
    h = (a0 @ x) @ params["weight"] + x @ params["root"] + params["bias"]
    if bf16_propagation:
        hp = h.astype(jnp.bfloat16).astype(jnp.float32)
        ap = a_motifs.astype(jnp.bfloat16).astype(jnp.float32)
    else:
        hp, ap = h, a_motifs
    motif_rsts = [h] + [ap[i] @ hp for i in range(NUM_MOTIFS)]
    embeds = []
    for i in range(1, NUM_MOTIFS + 1):
        compress_list = motif_rsts[:i] + motif_rsts[i + 1:]
        mw = motif_rsts[i] @ params["wa"] + params["ba"]
        c = jnp.concatenate(compress_list, axis=1) @ params["motif_w"][i - 1] \
            + params["motif_b"][i - 1]
        att = jax.nn.sigmoid(jnp.sum(mw * c, axis=1, keepdims=True))
        embeds.append(att * (mw - c))
    return jnp.concatenate(embeds, axis=1)


# ----------------------------------------------------------------------------
# Deterministic parameter / input construction
# ----------------------------------------------------------------------------
def _kaiming_uniform(key, shape):
    fan_in = shape[1]  # torch 2D convention: fan_in = size(1)
    bound = (6.0 / fan_in) ** 0.5
    return jax.random.uniform(key, shape, jnp.float32, -bound, bound)


def make_params(key, in_channels, out_channels, d):
    ks = jax.random.split(key, 4 + NUM_MOTIFS)
    return {
        "weight": _kaiming_uniform(ks[0], (in_channels, out_channels)),
        "root": _kaiming_uniform(ks[1], (in_channels, out_channels)),
        "bias": jnp.zeros((out_channels,), jnp.float32),
        "wa": _kaiming_uniform(ks[2], (out_channels, d)),
        "ba": jnp.zeros((d,), jnp.float32),
        "wb": _kaiming_uniform(ks[3], (out_channels, d)),  # unused in forward
        "motif_w": jnp.stack(
            [_kaiming_uniform(ks[4 + i], (out_channels * NUM_MOTIFS, d))
             for i in range(NUM_MOTIFS)]),
        "motif_b": jnp.zeros((NUM_MOTIFS, d), jnp.float32),
    }


def make_dense_graph(key, n):
    km, kw = jax.random.split(key)
    mask = jax.random.bernoulli(km, 0.15, (n, n)).astype(jnp.float32)
    w = jax.random.uniform(kw, (n, n), jnp.float32, 0.1, 1.0)
    return mask * w


if __name__ == "__main__":
    N, C_IN, C_OUT, D, TM = 256, 16, 16, 8, 128

    root_key = jax.random.PRNGKey(0)
    kp, kx, kg = jax.random.split(root_key, 3)

    params = make_params(kp, C_IN, C_OUT, D)
    x = jax.random.normal(kx, (N, C_IN), jnp.float32)

    gkeys = jax.random.split(kg, NUM_MOTIFS + 1)
    a0 = make_dense_graph(gkeys[0], N)                       # graph0 (edge_weight4norm)
    a_motifs = jnp.stack([make_dense_graph(gkeys[1 + i], N)  # motifs  (edge_weight4motif)
                          for i in range(NUM_MOTIFS)])

    out = motif_conv_forward(params, a0, a_motifs, x, tm=TM)
    out = jax.block_until_ready(out)
    assert out.shape == (N, NUM_MOTIFS * D), out.shape

    # Validate against a reference that applies the same bf16 rounding to the
    # motif-propagation operands (the only intentional precision change).
    ref = motif_conv_reference(params, a0, a_motifs, x, bf16_propagation=True)
    err = float(jnp.max(jnp.abs(out - ref)))
    assert jnp.allclose(out, ref, rtol=1e-2, atol=1e-2), err

    print("KERNEL_OK")
</pallas_src>

<mosaic_0001>
module attributes {stable_mosaic.version = 11 : i64} {
  func.func @_gcn_linear_kernel(%arg0: i32, %arg1: memref<128x256xf32, #tpu.memory_space<vmem>>, %arg2: memref<256x16xf32, #tpu.memory_space<vmem>>, %arg3: memref<128x16xf32, #tpu.memory_space<vmem>>, %arg4: memref<16x16xf32, #tpu.memory_space<vmem>>, %arg5: memref<16x16xf32, #tpu.memory_space<vmem>>, %arg6: memref<1x16xf32, #tpu.memory_space<vmem>>, %arg7: memref<128x16xf32, #tpu.memory_space<vmem>>, %arg8: memref<128x16xbf16, #tpu.memory_space<vmem>>) attributes {dimension_semantics = [#tpu.dimension_semantics<parallel>], iteration_bounds = array<i64: 2>, scalar_prefetch = 0 : i64, scratch_operands = 0 : i64, tpu.core_type = #tpu.core_type<tc>, window_params = [{transform_indices = @transform_0, window_bounds = array<i64: 128, 256>}, {pipeline_mode = #tpu.pipeline_mode<synchronous>, transform_indices = @transform_1, window_bounds = array<i64: 256, 16>}, {transform_indices = @transform_2, window_bounds = array<i64: 128, 16>}, {pipeline_mode = #tpu.pipeline_mode<synchronous>, transform_indices = @transform_3, window_bounds = array<i64: 16, 16>}, {pipeline_mode = #tpu.pipeline_mode<synchronous>, transform_indices = @transform_4, window_bounds = array<i64: 16, 16>}, {pipeline_mode = #tpu.pipeline_mode<synchronous>, transform_indices = @transform_5, window_bounds = array<i64: 1, 16>}, {transform_indices = @transform_6, window_bounds = array<i64: 128, 16>}, {transform_indices = @transform_7, window_bounds = array<i64: 128, 16>}]} {
    %c0 = arith.constant 0 : index
    %c0_0 = arith.constant 0 : index
    %0 = vector.load %arg1[%c0, %c0_0] : memref<128x256xf32, #tpu.memory_space<vmem>>, vector<128x256xf32>
    %c0_1 = arith.constant 0 : index
    %c0_2 = arith.constant 0 : index
    %1 = vector.load %arg2[%c0_1, %c0_2] : memref<256x16xf32, #tpu.memory_space<vmem>>, vector<256x16xf32>
    %cst = arith.constant dense<0.000000e+00> : vector<128x16xf32>
    %2 = tpu.matmul %0, %1, %cst {dimension_numbers = #tpu.dot_dimension_numbers<[1], [0], [0], [1], [0, 0, 1, 1], [], []>} : vector<128x256xf32>, vector<256x16xf32>, vector<128x16xf32> -> vector<128x16xf32>
    %c0_3 = arith.constant 0 : index
    %c0_4 = arith.constant 0 : index
    %3 = vector.load %arg4[%c0_3, %c0_4] : memref<16x16xf32, #tpu.memory_space<vmem>>, vector<16x16xf32>
    %cst_5 = arith.constant dense<0.000000e+00> : vector<128x16xf32>
    %4 = tpu.matmul %2, %3, %cst_5 {dimension_numbers = #tpu.dot_dimension_numbers<[1], [0], [0], [1], [0, 0, 1, 1], [], []>} : vector<128x16xf32>, vector<16x16xf32>, vector<128x16xf32> -> vector<128x16xf32>
    %c0_6 = arith.constant 0 : index
    %c0_7 = arith.constant 0 : index
    %5 = vector.load %arg3[%c0_6, %c0_7] : memref<128x16xf32, #tpu.memory_space<vmem>>, vector<128x16xf32>
    %c0_8 = arith.constant 0 : index
    %c0_9 = arith.constant 0 : index
    %6 = vector.load %arg5[%c0_8, %c0_9] : memref<16x16xf32, #tpu.memory_space<vmem>>, vector<16x16xf32>
    %cst_10 = arith.constant dense<0.000000e+00> : vector<128x16xf32>
    %7 = tpu.matmul %5, %6, %cst_10 {dimension_numbers = #tpu.dot_dimension_numbers<[1], [0], [0], [1], [0, 0, 1, 1], [], []>} : vector<128x16xf32>, vector<16x16xf32>, vector<128x16xf32> -> vector<128x16xf32>
    %8 = arith.addf %4, %7 : vector<128x16xf32>
    %c0_11 = arith.constant 0 : index
    %c0_12 = arith.constant 0 : index
    %9 = vector.load %arg6[%c0_11, %c0_12] : memref<1x16xf32, #tpu.memory_space<vmem>>, vector<1x16xf32>
    %10 = vector.broadcast %9 : vector<1x16xf32> to vector<128x16xf32>
    %11 = arith.addf %8, %10 : vector<128x16xf32>
    %c0_13 = arith.constant 0 : index
    %c0_14 = arith.constant 0 : index
    %12 = vector.load %arg7[%c0_13, %c0_14] : memref<128x16xf32, #tpu.memory_space<vmem>>, vector<128x16xf32>
    tpu.vector_store %arg7[%c0_13, %c0_14], %11 {strides = array<i32>} : memref<128x16xf32, #tpu.memory_space<vmem>>, vector<128x16xf32>,
    %13 = arith.truncf %11 : vector<128x16xf32> to vector<128x16xbf16>
    %c0_15 = arith.constant 0 : index
    %c0_16 = arith.constant 0 : index
    %14 = vector.load %arg8[%c0_15, %c0_16] : memref<128x16xbf16, #tpu.memory_space<vmem>>, vector<128x16xbf16>
    tpu.vector_store %arg8[%c0_15, %c0_16], %13 {strides = array<i32>} : memref<128x16xbf16, #tpu.memory_space<vmem>>, vector<128x16xbf16>,
    return
  }
  func.func @transform_0(%arg0: i32) -> (i32, i32) {
    %c0_i32 = arith.constant 0 : i32
    %c0_i32_0 = arith.constant 0 : i32
    return %arg0, %c0_i32 : i32, i32
  }
  func.func @transform_1(%arg0: i32) -> (i32, i32) {
    %c0_i32 = arith.constant 0 : i32
    %c0_i32_0 = arith.constant 0 : i32
    %c0_i32_1 = arith.constant 0 : i32
    return %c0_i32, %c0_i32_0 : i32, i32
  }
  func.func @transform_2(%arg0: i32) -> (i32, i32) {
    %c0_i32 = arith.constant 0 : i32
    %c0_i32_0 = arith.constant 0 : i32
    return %arg0, %c0_i32 : i32, i32
  }
  func.func @transform_3(%arg0: i32) -> (i32, i32) {
    %c0_i32 = arith.constant 0 : i32
    %c0_i32_0 = arith.constant 0 : i32
    %c0_i32_1 = arith.constant 0 : i32
    return %c0_i32, %c0_i32_0 : i32, i32
  }
  func.func @transform_4(%arg0: i32) -> (i32, i32) {
    %c0_i32 = arith.constant 0 : i32
    %c0_i32_0 = arith.constant 0 : i32
    %c0_i32_1 = arith.constant 0 : i32
    return %c0_i32, %c0_i32_0 : i32, i32
  }
  func.func @transform_5(%arg0: i32) -> (i32, i32) {
    %c0_i32 = arith.constant 0 : i32
    %c0_i32_0 = arith.constant 0 : i32
    %c0_i32_1 = arith.constant 0 : i32
    return %c0_i32, %c0_i32_0 : i32, i32
  }
  func.func @transform_6(%arg0: i32) -> (i32, i32) {
    %c0_i32 = arith.constant 0 : i32
    %c0_i32_0 = arith.constant 0 : i32
    return %arg0, %c0_i32 : i32, i32
  }
  func.func @transform_7(%arg0: i32) -> (i32, i32) {
    %c0_i32 = arith.constant 0 : i32
    %c0_i32_0 = arith.constant 0 : i32
    return %arg0, %c0_i32 : i32, i32
  }
}

</mosaic_0001>

<llo_original>
// kernel: tpu_custom_call.1
$region0: #{tpu_custom_call.1}
  #allocation0 [shape = 'u32[]', space=smem, size = 0x4, offset = 0x4, fixed_abs, tag = 'smem constant byte address 0x4 - core index']
  #allocation1 [shape = 'u32[144,128]{1,0:T(1,128)}', space=vmem, size = 0x12000, scoped, tag = 'internal scratch']
  %s0 = inlined_call_operand.hbm [shape: f32[256,256], index: 0, kind: input, shape index: {}]
  %s1 = inlined_call_operand.hbm [shape: f32[256,16], index: 1, kind: input, shape index: {}]
  %s2 = inlined_call_operand.hbm [shape: f32[256,16], index: 2, kind: input, shape index: {}]
  %s3 = inlined_call_operand.hbm [shape: f32[16,16], index: 3, kind: input, shape index: {}]
  %s4 = inlined_call_operand.hbm [shape: f32[16,16], index: 4, kind: input, shape index: {}]
  %s5 = inlined_call_operand.hbm [shape: f32[1,16], index: 5, kind: input, shape index: {}]
  %s6 = inlined_call_operand.hbm [shape: f32[256,16], index: 6, kind: output, shape index: {0}]
  %s7 = inlined_call_operand.hbm [shape: bf16[256,16], index: 7, kind: output, shape index: {1}]
  %8 = xla_tuple %s6, %s7
  %s9 = sld [smem:[#allocation0]]
  $region89: #{tpu_custom_call.1} parent=0
    _
  %s11 = ssub.s32 1, %s9
  %s12 = scalar_select 0, %s11, %s9
  $region1: #{tpu_custom_call.1} parent=0
    #allocation2 [shape = 'u8[262144]{0}', space=vmem, size = 0x40000, scoped, tag = 'input window, operand 0']
    #allocation3 [shape = 's32[2]{0}', space=sflag, size = 0x8, scoped, tag = 'scoped memory for tpu_custom_call.1']
    #allocation4 [shape = 's32[2]{0}', space=sflag, size = 0x8, scoped, tag = 'scoped memory for tpu_custom_call.1']
    #allocation5 [shape = 'u8[131072]{0}', space=vmem, size = 0x20000, scoped, tag = 'input window, operand 1, single buffered']
    #allocation6 [shape = 's32[1]{0}', space=sflag, size = 0x4, scoped, tag = 'scoped memory for tpu_custom_call.1']
    #allocation7 [shape = 'u8[131072]{0}', space=vmem, size = 0x20000, scoped, tag = 'input window, operand 2']
    #allocation8 [shape = 'u8[8192]{0}', space=vmem, size = 0x2000, scoped, tag = 'input window, operand 3, single buffered']
    #allocation9 [shape = 'u8[8192]{0}', space=vmem, size = 0x2000, scoped, tag = 'input window, operand 4, single buffered']
    #allocation10 [shape = 's32[1]{0}', space=sflag, size = 0x4, scoped, tag = 'scoped memory for tpu_custom_call.1']
    #allocation11 [shape = 'u8[512]{0}', space=vmem, size = 0x400, scoped, tag = 'input window, operand 5, single buffered']
    #allocation12 [shape = 'u8[131072]{0}', space=vmem, size = 0x20000, scoped, tag = 'output window, operand 0']
    #allocation13 [shape = 'u8[65536]{0}', space=vmem, size = 0x10000, scoped, tag = 'output window, operand 1']
    #allocation14 [shape = 's32[2]{0}', space=sflag, size = 0x8, scoped, tag = 'scoped memory for tpu_custom_call.1']
    %13 = vsyncpa [#allocation3], 0
    %s14 = scalar_lea.sflag [#allocation3], 1
    %15 = vsyncpa %s14, 0
    %16 = vsyncpa [#allocation6], 0
    %17 = vsyncpa [#allocation10], 0
    %18 = vsyncpa [#allocation4], 0
    %s19 = scalar_lea.sflag [#allocation4], 1
    %20 = vsyncpa %s19, 0
    %21 = vsyncpa [#allocation14], 0
    %s22 = scalar_lea.sflag [#allocation14], 1
    %23 = vsyncpa %s22, 0
    loop: start=0, step=1, limit=4
    $region2: #{tpu_custom_call.1} parent=1 // loop_pre_header
      _
    $region3: #{tpu_custom_call.1} parent=1 // loop_header
      %s25 = sphi 0, %s29
      %p26 = scmp.ge.s32.totalorder %s25, 4
      %s35 = sphi 0, %s37
      %s38 = sphi 0, %s35
      %s39 = sphi 0, %s38
      %s55 = sphi 0, %s39
      %s59 = sphi 0, %s59
      %s61 = sphi 0, %s59
      %s62 = sphi 0, %s61
      %s76 = sphi 0, %s62
      %s82 = sphi 0, %s84
      %s85 = sphi 0, %s82
      %s86 = sphi 0, %s85
      %s102 = sphi 0, %s86
      %s106 = sphi 0, %s106
      %s108 = sphi 0, %s106
      %s109 = sphi 0, %s108
      %s123 = sphi 0, %s109
      %s127 = sphi 0, %s127
      %s129 = sphi 0, %s127
      %s130 = sphi 0, %s129
      %s144 = sphi 0, %s130
      %s148 = sphi 0, %s148
      %s150 = sphi 0, %s148
      %s151 = sphi 0, %s150
      %s165 = sphi 0, %s151
      %s171 = sphi 0, %s173
      %s174 = sphi 0, %s171
      %s175 = sphi 0, %s174
      %s191 = sphi 0, %s175
      %s197 = sphi 0, %s199
      %s200 = sphi 0, %s197
      %s201 = sphi 0, %s200
      %s217 = sphi 0, %s201
    $region4: #{tpu_custom_call.1} parent=1 // loop_header_branch
      %28 = sbr.rel (%p26) target = $region8
    $region5: #{tpu_custom_call.1} parent=1 // loop_body
      %s30 = ssub.s32 %s25, 1
      %s31 = ssub.s32 %s25, 2
      %s32 = sadd.s32 %s25, 1
      %s33 = ssub.s32 %s25, %s32
      %p34 = scmp.eq.s32.totalorder %s33, 0
      %s36 = sadd.s32 %s35, 1
      %s37 = scalar_select %p34, %s35, %s36
      %p40 = pneg %p34
      %p41 = scmp.eq.s32.totalorder %s25, 1
      %p42 = por %p40, %p41
      %p43 = scmp.ne.s32.totalorder %s35, %s38
      %p44 = scmp.eq.s32.totalorder %s25, 0
      %p45 = por %p43, %p44
      %p46 = scmp.ne.s32.totalorder %s35, %s38
      %p47 = scmp.eq.s32.totalorder %s30, 1
      %p48 = por %p46, %p47
      %p49 = scmp.ne.s32.totalorder %s38, %s39
      %p50 = scmp.eq.s32.totalorder %s30, 0
      %p51 = por %p49, %p50
      %p52 = scmp.ne.s32.totalorder %s38, %s39
      %p53 = scmp.eq.s32.totalorder %s31, 1
      %p54 = por %p52, %p53
      %p56 = scmp.ne.s32.totalorder %s39, %s55
      %p57 = scmp.eq.s32.totalorder %s31, 0
      %p58 = por %p56, %p57
      %s60 = sadd.s32 %s59, 1
      %p63 = scmp.eq.s32.totalorder %s25, 1
      %p64 = scmp.ne.s32.totalorder %s59, %s61
      %p65 = scmp.eq.s32.totalorder %s25, 0
      %p66 = por %p64, %p65
      %p67 = scmp.ne.s32.totalorder %s59, %s61
      %p68 = scmp.eq.s32.totalorder %s30, 1
      %p69 = por %p67, %p68
      %p70 = scmp.ne.s32.totalorder %s61, %s62
      %p71 = scmp.eq.s32.totalorder %s30, 0
      %p72 = por %p70, %p71
      %p73 = scmp.ne.s32.totalorder %s61, %s62
      %p74 = scmp.eq.s32.totalorder %s31, 1
      %p75 = por %p73, %p74
      %p77 = scmp.ne.s32.totalorder %s62, %s76
      %p78 = scmp.eq.s32.totalorder %s31, 0
      %p79 = por %p77, %p78
      %s80 = ssub.s32 %s25, %s32
      %p81 = scmp.eq.s32.totalorder %s80, 0
      %s83 = sadd.s32 %s82, 1
      %s84 = scalar_select %p81, %s82, %s83
      %p87 = pneg %p81
      %p88 = scmp.eq.s32.totalorder %s25, 1
      %p89 = por %p87, %p88
      %p90 = scmp.ne.s32.totalorder %s82, %s85
      %p91 = scmp.eq.s32.totalorder %s25, 0
      %p92 = por %p90, %p91
      %p93 = scmp.ne.s32.totalorder %s82, %s85
      %p94 = scmp.eq.s32.totalorder %s30, 1
      %p95 = por %p93, %p94
      %p96 = scmp.ne.s32.totalorder %s85, %s86
      %p97 = scmp.eq.s32.totalorder %s30, 0
      %p98 = por %p96, %p97
      %p99 = scmp.ne.s32.totalorder %s85, %s86
      %p100 = scmp.eq.s32.totalorder %s31, 1
      %p101 = por %p99, %p100
      %p103 = scmp.ne.s32.totalorder %s86, %s102
      %p104 = scmp.eq.s32.totalorder %s31, 0
      %p105 = por %p103, %p104
      %s107 = sadd.s32 %s106, 1
      %p110 = scmp.eq.s32.totalorder %s25, 1
      %p111 = scmp.ne.s32.totalorder %s106, %s108
      %p112 = scmp.eq.s32.totalorder %s25, 0
      %p113 = por %p111, %p112
      %p114 = scmp.ne.s32.totalorder %s106, %s108
      %p115 = scmp.eq.s32.totalorder %s30, 1
      %p116 = por %p114, %p115
      %p117 = scmp.ne.s32.totalorder %s108, %s109
      %p118 = scmp.eq.s32.totalorder %s30, 0
      %p119 = por %p117, %p118
      %p120 = scmp.ne.s32.totalorder %s108, %s109
      %p121 = scmp.eq.s32.totalorder %s31, 1
      %p122 = por %p120, %p121
      %p124 = scmp.ne.s32.totalorder %s109, %s123
      %p125 = scmp.eq.s32.totalorder %s31, 0
      %p126 = por %p124, %p125
      %s128 = sadd.s32 %s127, 1
      %p131 = scmp.eq.s32.totalorder %s25, 1
      %p132 = scmp.ne.s32.totalorder %s127, %s129
      %p133 = scmp.eq.s32.totalorder %s25, 0
      %p134 = por %p132, %p133
      %p135 = scmp.ne.s32.totalorder %s127, %s129
      %p136 = scmp.eq.s32.totalorder %s30, 1
      %p137 = por %p135, %p136
      %p138 = scmp.ne.s32.totalorder %s129, %s130
      %p139 = scmp.eq.s32.totalorder %s30, 0
      %p140 = por %p138, %p139
      %p141 = scmp.ne.s32.totalorder %s129, %s130
      %p142 = scmp.eq.s32.totalorder %s31, 1
      %p143 = por %p141, %p142
      %p145 = scmp.ne.s32.totalorder %s130, %s144
      %p146 = scmp.eq.s32.totalorder %s31, 0
      %p147 = por %p145, %p146
      %s149 = sadd.s32 %s148, 1
      %p152 = scmp.eq.s32.totalorder %s25, 1
      %p153 = scmp.ne.s32.totalorder %s148, %s150
      %p154 = scmp.eq.s32.totalorder %s25, 0
      %p155 = por %p153, %p154
      %p156 = scmp.ne.s32.totalorder %s148, %s150
      %p157 = scmp.eq.s32.totalorder %s30, 1
      %p158 = por %p156, %p157
      %p159 = scmp.ne.s32.totalorder %s150, %s151
      %p160 = scmp.eq.s32.totalorder %s30, 0
      %p161 = por %p159, %p160
      %p162 = scmp.ne.s32.totalorder %s150, %s151
      %p163 = scmp.eq.s32.totalorder %s31, 1
      %p164 = por %p162, %p163
      %p166 = scmp.ne.s32.totalorder %s151, %s165
      %p167 = scmp.eq.s32.totalorder %s31, 0
      %p168 = por %p166, %p167
      %s169 = ssub.s32 %s25, %s32
      %p170 = scmp.eq.s32.totalorder %s169, 0
      %s172 = sadd.s32 %s171, 1
      %s173 = scalar_select %p170, %s171, %s172
      %p176 = pneg %p170
      %p177 = scmp.eq.s32.totalorder %s25, 1
      %p178 = por %p176, %p177
      %p179 = scmp.ne.s32.totalorder %s171, %s174
      %p180 = scmp.eq.s32.totalorder %s25, 0
      %p181 = por %p179, %p180
      %p182 = scmp.ne.s32.totalorder %s171, %s174
      %p183 = scmp.eq.s32.totalorder %s30, 1
      %p184 = por %p182, %p183
      %p185 = scmp.ne.s32.totalorder %s174, %s175
      %p186 = scmp.eq.s32.totalorder %s30, 0
      %p187 = por %p185, %p186
      %p188 = scmp.ne.s32.totalorder %s174, %s175
      %p189 = scmp.eq.s32.totalorder %s31, 1
      %p190 = por %p188, %p189
      %p192 = scmp.ne.s32.totalorder %s175, %s191
      %p193 = scmp.eq.s32.totalorder %s31, 0
      %p194 = por %p192, %p193
      %s195 = ssub.s32 %s25, %s32
      %p196 = scmp.eq.s32.totalorder %s195, 0
      %s198 = sadd.s32 %s197, 1
      %s199 = scalar_select %p196, %s197, %s198
      %p202 = pneg %p196
      %p203 = scmp.eq.s32.totalorder %s25, 1
      %p204 = por %p202, %p203
      %p205 = scmp.ne.s32.totalorder %s197, %s200
      %p206 = scmp.eq.s32.totalorder %s25, 0
      %p207 = por %p205, %p206
      %p208 = scmp.ne.s32.totalorder %s197, %s200
      %p209 = scmp.eq.s32.totalorder %s30, 1
      %p210 = por %p208, %p209
      %p211 = scmp.ne.s32.totalorder %s200, %s201
      %p212 = scmp.eq.s32.totalorder %s30, 0
      %p213 = por %p211, %p212
      %p214 = scmp.ne.s32.totalorder %s200, %s201
      %p215 = scmp.eq.s32.totalorder %s31, 1
      %p216 = por %p214, %p215
      %p218 = scmp.ne.s32.totalorder %s201, %s217
      %p219 = scmp.eq.s32.totalorder %s31, 0
      %p220 = por %p218, %p219
      %p221 = scmp.le.s32.totalorder 1, %s25
      %p222 = scmp.lt.s32.totalorder %s25, 3
      %p223 = pnand %p221, %p222
      %p224 = pneg %p223
      // Predicated region
      $region9: #{tpu_custom_call.1} parent=5 // pred_check
        _
      $region10: #{tpu_custom_call.1} parent=5 // pred_check_branch
        %226 = sbr.rel (%p223) target = $region12
      $region11: #{tpu_custom_call.1} parent=5 // pred_region
        %s227 = ssub.s32 %s25, 1
        // Predicated region
        $region13: #{tpu_custom_call.1} parent=11 // pred_check
          %p228 = pneg %p72
        $region14: #{tpu_custom_call.1} parent=11 // pred_check_branch
          %230 = sbr.rel (%p228) target = $region16
        $region15: #{tpu_custom_call.1} parent=11 // pred_region
          %s232 = ssub.s32 4096, 4096
          %233 = vsyncadd [#allocation6], %s232
          %s234 = sshll.u32 [#allocation5], 4
          %s235 = int_to_ptr.vmem [resolvable:$true] %s234
          %240 = dma.hbm_to_vmem [thread:$0]  %s1, 4096, %s235, [#allocation6], 128, 128, 8
        $region16: #{tpu_custom_call.1} parent=11 // pred_fallthru
          _
        // Predicated region
        $region17: #{tpu_custom_call.1} parent=11 // pred_check
          %p241 = pneg %p119
        $region18: #{tpu_custom_call.1} parent=11 // pred_check_branch
          %243 = sbr.rel (%p241) target = $region20
        $region19: #{tpu_custom_call.1} parent=11 // pred_region
          %s245 = ssub.s32 256, 256
          %246 = vsyncadd [#allocation6], %s245
          %s247 = sshll.u32 [#allocation8], 4
          %s248 = int_to_ptr.vmem [resolvable:$true] %s247
          %253 = dma.hbm_to_vmem [thread:$0]  %s3, 256, %s248, [#allocation6], 128, 128, 8
        $region20: #{tpu_custom_call.1} parent=11 // pred_fallthru
          _
        // Predicated region
        $region21: #{tpu_custom_call.1} parent=11 // pred_check
          %p254 = pneg %p140
        $region22: #{tpu_custom_call.1} parent=11 // pred_check_branch
          %256 = sbr.rel (%p254) target = $region24
        $region23: #{tpu_custom_call.1} parent=11 // pred_region
          %s258 = ssub.s32 256, 256
          %259 = vsyncadd [#allocation10], %s258
          %s260 = sshll.u32 [#allocation9], 4
          %s261 = int_to_ptr.vmem [resolvable:$true] %s260
          %266 = dma.hbm_to_vmem [thread:$0]  %s4, 256, %s261, [#allocation10], 128, 128, 8
        $region24: #{tpu_custom_call.1} parent=11 // pred_fallthru
          _
        // Predicated region
        $region25: #{tpu_custom_call.1} parent=11 // pred_check
          %p267 = pneg %p161
        $region26: #{tpu_custom_call.1} parent=11 // pred_check_branch
          %269 = sbr.rel (%p267) target = $region28
        $region27: #{tpu_custom_call.1} parent=11 // pred_region
          %s271 = ssub.s32 16, 16
          %272 = vsyncadd [#allocation10], %s271
          %s274 = sshll.u32 [#allocation11], 4
          %s275 = int_to_ptr.vmem [resolvable:$true] %s274
          %277 = dma.hbm_to_vmem [thread:$0]  %s5, 16, %s275, [#allocation10]
        $region28: #{tpu_custom_call.1} parent=11 // pred_fallthru
          _
      $region12: #{tpu_custom_call.1} parent=5 // pred_fallthru
        _
      %p278 = scmp.lt.s32.totalorder %s25, 2
      // Predicated region
      $region29: #{tpu_custom_call.1} parent=5 // pred_check
        %p279 = pneg %p278
      $region30: #{tpu_custom_call.1} parent=5 // pred_check_branch
        %281 = sbr.rel (%p279) target = $region32
      $region31: #{tpu_custom_call.1} parent=5 // pred_region
        // Predicated region
        $region33: #{tpu_custom_call.1} parent=31 // pred_check
          %p282 = pneg %p45
        $region34: #{tpu_custom_call.1} parent=31 // pred_check_branch
          %284 = sbr.rel (%p282) target = $region36
        $region35: #{tpu_custom_call.1} parent=31 // pred_region
          %s285 = sand.u32 %s25, 1
          %s286 = scalar_lea.sflag [#allocation3], %s285
          %s287 = sand.u32 %s35, 1
          %s288 = smul.addr %s287, 256
          %s289 = scalar_lea.vmem [#allocation2], %s288
          %s290 = smul.u32 16, %s25
          %s292 = ssub.s32 4096, 4096
          %293 = vsyncadd %s286, %s292
          %s294 = smul.addr %s290, 2
          %s295 = smul.addr %s294, 128
          %s296 = scalar_lea.hbm %s0, %s295
          %s297 = sshll.u32 %s289, 4
          %s298 = int_to_ptr.vmem [resolvable:$true] %s297
          %303 = dma.hbm_to_vmem [thread:$0]  %s296, 4096, %s298, %s286, 256, 256, 16
        $region36: #{tpu_custom_call.1} parent=31 // pred_fallthru
          _
        // Predicated region
        $region37: #{tpu_custom_call.1} parent=31 // pred_check
          %p304 = pneg %p92
        $region38: #{tpu_custom_call.1} parent=31 // pred_check_branch
          %306 = sbr.rel (%p304) target = $region40
        $region39: #{tpu_custom_call.1} parent=31 // pred_region
          %s307 = sand.u32 %s25, 1
          %s308 = scalar_lea.sflag [#allocation3], %s307
          %s309 = sand.u32 %s82, 1
          %s310 = smul.addr %s309, 128
          %s311 = scalar_lea.vmem [#allocation7], %s310
          %s312 = smul.u32 16, %s25
          %s314 = ssub.s32 2048, 2048
          %315 = vsyncadd %s308, %s314
          %s316 = smul.addr %s312, 128
          %s317 = scalar_lea.hbm %s2, %s316
          %s318 = sshll.u32 %s311, 4
          %s319 = int_to_ptr.vmem [resolvable:$true] %s318
          %324 = dma.hbm_to_vmem [thread:$0]  %s317, 2048, %s319, %s308, 128, 128, 8
        $region40: #{tpu_custom_call.1} parent=31 // pred_fallthru
          _
      $region32: #{tpu_custom_call.1} parent=5 // pred_fallthru
        _
      %p325 = scmp.le.s32.totalorder 1, %s25
      %p326 = scmp.lt.s32.totalorder %s25, 3
      %p327 = pnand %p325, %p326
      %p328 = pneg %p327
      // Predicated region
      $region41: #{tpu_custom_call.1} parent=5 // pred_check
        _
      $region42: #{tpu_custom_call.1} parent=5 // pred_check_branch
        %330 = sbr.rel (%p327) target = $region44
      $region43: #{tpu_custom_call.1} parent=5 // pred_region
        %s331 = ssub.s32 %s25, 1
        %s332 = sand.u32 %s30, 1
        %s333 = scalar_lea.sflag [#allocation3], %s332
        %s334 = sand.u32 %s38, 1
        %s335 = smul.addr %s334, 256
        %s336 = scalar_lea.vmem [#allocation2], %s335
        // Predicated region
        $region45: #{tpu_custom_call.1} parent=43 // pred_check
          %p337 = pneg %p51
        $region46: #{tpu_custom_call.1} parent=43 // pred_check_branch
          %339 = sbr.rel (%p337) target = $region48
        $region47: #{tpu_custom_call.1} parent=43 // pred_region
          %340 = dma.done %s333, 4096
        $region48: #{tpu_custom_call.1} parent=43 // pred_fallthru
          _
        // Predicated region
        $region49: #{tpu_custom_call.1} parent=43 // pred_check
          %p341 = pneg %p72
        $region50: #{tpu_custom_call.1} parent=43 // pred_check_branch
          %343 = sbr.rel (%p341) target = $region52
        $region51: #{tpu_custom_call.1} parent=43 // pred_region
          %344 = dma.done [#allocation6], 4096
        $region52: #{tpu_custom_call.1} parent=43 // pred_fallthru
          _
        %s345 = sand.u32 %s30, 1
        %s346 = scalar_lea.sflag [#allocation3], %s345
        %s347 = sand.u32 %s85, 1
        %s348 = smul.addr %s347, 128
        %s349 = scalar_lea.vmem [#allocation7], %s348
        // Predicated region
        $region53: #{tpu_custom_call.1} parent=43 // pred_check
          %p350 = pneg %p98
        $region54: #{tpu_custom_call.1} parent=43 // pred_check_branch
          %352 = sbr.rel (%p350) target = $region56
        $region55: #{tpu_custom_call.1} parent=43 // pred_region
          %353 = dma.done %s346, 2048
        $region56: #{tpu_custom_call.1} parent=43 // pred_fallthru
          _
        // Predicated region
        $region57: #{tpu_custom_call.1} parent=43 // pred_check
          %p354 = pneg %p119
        $region58: #{tpu_custom_call.1} parent=43 // pred_check_branch
          %356 = sbr.rel (%p354) target = $region60
        $region59: #{tpu_custom_call.1} parent=43 // pred_region
          %357 = dma.done [#allocation6], 256
        $region60: #{tpu_custom_call.1} parent=43 // pred_fallthru
          _
        // Predicated region
        $region61: #{tpu_custom_call.1} parent=43 // pred_check
          %p358 = pneg %p140
        $region62: #{tpu_custom_call.1} parent=43 // pred_check_branch
          %360 = sbr.rel (%p358) target = $region64
        $region63: #{tpu_custom_call.1} parent=43 // pred_region
          %361 = dma.done [#allocation10], 256
        $region64: #{tpu_custom_call.1} parent=43 // pred_fallthru
          _
        // Predicated region
        $region65: #{tpu_custom_call.1} parent=43 // pred_check
          %p362 = pneg %p161
        $region66: #{tpu_custom_call.1} parent=43 // pred_check_branch
          %364 = sbr.rel (%p362) target = $region68
        $region67: #{tpu_custom_call.1} parent=43 // pred_region
          %365 = dma.done [#allocation10], 16
        $region68: #{tpu_custom_call.1} parent=43 // pred_fallthru
          _
        %s366 = sand.u32 %s30, 1
        %s367 = scalar_lea.sflag [#allocation3], %s366
        %s368 = sand.u32 %s38, 1
        %s369 = smul.addr %s368, 256
        %s370 = scalar_lea.vmem [#allocation2], %s369
        %p371 = pneg %p51
        %p372 = pneg %p48
        %p373 = pneg %p72
        %p374 = pneg %p69
        %s375 = sand.u32 %s30, 1
        %s376 = scalar_lea.sflag [#allocation3], %s375
        %s377 = sand.u32 %s85, 1
        %s378 = smul.addr %s377, 128
        %s379 = scalar_lea.vmem [#allocation7], %s378
        %p380 = pneg %p98
        %p381 = pneg %p95
        %p382 = pneg %p119
        %p383 = pneg %p116
        %p384 = pneg %p140
        %p385 = pneg %p137
        %p386 = pneg %p161
        %p387 = pneg %p158
        %p388 = pneg %p187
        %p389 = pneg %p184
        %s390 = sand.u32 %s174, 1
        %s391 = scalar_lea.sflag [#allocation4], %s390
        %s392 = sand.u32 %s174, 1
        %s393 = smul.addr %s392, 128
        %s394 = scalar_lea.vmem [#allocation12], %s393
        %p395 = pneg %p213
        %p396 = pneg %p210
        %s397 = sand.u32 %s200, 1
        %s398 = scalar_lea.sflag [#allocation14], %s397
        %s399 = sand.u32 %s200, 1
        %s400 = smul.addr %s399, 64
        %s401 = scalar_lea.vmem [#allocation13], %s400
        %s402 = smul.u32 16, %s30
        %s403 = smul.u32 16, %s30
        %s404 = smul.u32 16, %s30
        %s405 = smul.u32 16, %s30
        %v406 = vld [vmem:[%s336] sm:$0xff]
        %v407 = vld [vmem:[%s336 + $0x8] sm:$0xff]
        %v408 = vld [vmem:[%s336 + $0x10] sm:$0xff]
        %v409 = vld [vmem:[%s336 + $0x18] sm:$0xff]
        %v410 = vld [vmem:[%s336 + $0x20] sm:$0xff]
        %v411 = vld [vmem:[%s336 + $0x28] sm:$0xff]
        %v412 = vld [vmem:[%s336 + $0x30] sm:$0xff]
        %v413 = vld [vmem:[%s336 + $0x38] sm:$0xff]
        %v414 = vld [vmem:[%s336 + $0x40] sm:$0xff]
        %v415 = vld [vmem:[%s336 + $0x48] sm:$0xff]
        %v416 = vld [vmem:[%s336 + $0x50] sm:$0xff]
        %v417 = vld [vmem:[%s336 + $0x58] sm:$0xff]
        %v418 = vld [vmem:[%s336 + $0x60] sm:$0xff]
        %v419 = vld [vmem:[%s336 + $0x68] sm:$0xff]
        %v420 = vld [vmem:[%s336 + $0x70] sm:$0xff]
        %v421 = vld [vmem:[%s336 + $0x78] sm:$0xff]
        %v422 = vld [vmem:[%s336 + $0x80] sm:$0xff]
        %v423 = vld [vmem:[%s336 + $0x88] sm:$0xff]
        %v424 = vld [vmem:[%s336 + $0x90] sm:$0xff]
        %v425 = vld [vmem:[%s336 + $0x98] sm:$0xff]
        %v426 = vld [vmem:[%s336 + $0xa0] sm:$0xff]
        %v427 = vld [vmem:[%s336 + $0xa8] sm:$0xff]
        %v428 = vld [vmem:[%s336 + $0xb0] sm:$0xff]
        %v429 = vld [vmem:[%s336 + $0xb8] sm:$0xff]
        %v430 = vld [vmem:[%s336 + $0xc0] sm:$0xff]
        %v431 = vld [vmem:[%s336 + $0xc8] sm:$0xff]
        %v432 = vld [vmem:[%s336 + $0xd0] sm:$0xff]
        %v433 = vld [vmem:[%s336 + $0xd8] sm:$0xff]
        %v434 = vld [vmem:[%s336 + $0xe0] sm:$0xff]
        %v435 = vld [vmem:[%s336 + $0xe8] sm:$0xff]
        %v436 = vld [vmem:[%s336 + $0xf0] sm:$0xff]
        %v437 = vld [vmem:[%s336 + $0xf8] sm:$0xff]
        %v438 = vld [vmem:[#allocation5] sm:$0xff]
        %v439 = vld [vmem:[#allocation5 + $0x8] sm:$0xff]
        %v440 = vld [vmem:[#allocation5 + $0x10] sm:$0xff]
        %v441 = vld [vmem:[#allocation5 + $0x18] sm:$0xff]
        %v442 = vld [vmem:[#allocation5 + $0x20] sm:$0xff]
        %v443 = vld [vmem:[#allocation5 + $0x28] sm:$0xff]
        %v444 = vld [vmem:[#allocation5 + $0x30] sm:$0xff]
        %v445 = vld [vmem:[#allocation5 + $0x38] sm:$0xff]
        %v446 = vld [vmem:[#allocation5 + $0x40] sm:$0xff]
        %v447 = vld [vmem:[#allocation5 + $0x48] sm:$0xff]
        %v448 = vld [vmem:[#allocation5 + $0x50] sm:$0xff]
        %v449 = vld [vmem:[#allocation5 + $0x58] sm:$0xff]
        %v450 = vld [vmem:[#allocation5 + $0x60] sm:$0xff]
        %v451 = vld [vmem:[#allocation5 + $0x68] sm:$0xff]
        %v452 = vld [vmem:[#allocation5 + $0x70] sm:$0xff]
        %v453 = vld [vmem:[#allocation5 + $0x78] sm:$0xff]
        %v454 = vld [vmem:[#allocation5 + $0x80] sm:$0xff]
        %v455 = vld [vmem:[#allocation5 + $0x88] sm:$0xff]
        %v456 = vld [vmem:[#allocation5 + $0x90] sm:$0xff]
        %v457 = vld [vmem:[#allocation5 + $0x98] sm:$0xff]
        %v458 = vld [vmem:[#allocation5 + $0xa0] sm:$0xff]
        %v459 = vld [vmem:[#allocation5 + $0xa8] sm:$0xff]
        %v460 = vld [vmem:[#allocation5 + $0xb0] sm:$0xff]
        %v461 = vld [vmem:[#allocation5 + $0xb8] sm:$0xff]
        %v462 = vld [vmem:[#allocation5 + $0xc0] sm:$0xff]
        %v463 = vld [vmem:[#allocation5 + $0xc8] sm:$0xff]
        %v464 = vld [vmem:[#allocation5 + $0xd0] sm:$0xff]
        %v465 = vld [vmem:[#allocation5 + $0xd8] sm:$0xff]
        %v466 = vld [vmem:[#allocation5 + $0xe0] sm:$0xff]
        %v467 = vld [vmem:[#allocation5 + $0xe8] sm:$0xff]
        %v468 = vld [vmem:[#allocation5 + $0xf0] sm:$0xff]
        %v469 = vld [vmem:[#allocation5 + $0xf8] sm:$0xff]
        %470 = vmatprep.subr.mxu0 0.0
        %471 = vmatpush1.msra.mxu0 %v438
        %472 = vmatprep.subr.mxu0 0.0
        %473 = vmatpush1.msra.mxu0 %v439
        %474 = vmatprep.subr.mxu0 0.0
        %475 = vmatpush1.msra.mxu0 %v440
        %476 = vmatprep.subr.mxu0 0.0
        %477 = vmatpush1.msra.mxu0 %v441
        %478 = vmatprep.subr.mxu0 0.0
        %479 = vmatpush1.msra.mxu0 %v442
        %480 = vmatprep.subr.mxu0 0.0
        %481 = vmatpush1.msra.mxu0 %v443
        %482 = vmatprep.subr.mxu0 0.0
        %483 = vmatpush1.msra.mxu0 %v444
        %484 = vmatprep.subr.mxu0 0.0
        %485 = vmatpush1.msra.mxu0 %v445
        %486 = vmatprep.subr.mxu0 0.0
        %487 = vmatpush1.msra.mxu0 %v446
        %488 = vmatprep.subr.mxu0 0.0
        %489 = vmatpush1.msra.mxu0 %v447
        %490 = vmatprep.subr.mxu0 0.0
        %491 = vmatpush1.msra.mxu0 %v448
        %492 = vmatprep.subr.mxu0 0.0
        %493 = vmatpush1.msra.mxu0 %v449
        %494 = vmatprep.subr.mxu0 0.0
        %495 = vmatpush1.msra.mxu0 %v450
        %496 = vmatprep.subr.mxu0 0.0
        %497 = vmatpush1.msra.mxu0 %v451
        %498 = vmatprep.subr.mxu0 0.0
        %499 = vmatpush1.msra.mxu0 %v452
        %500 = vmatprep.subr.mxu0 0.0
        %501 = vmatpush1.msra.mxu0 %v453
        %502 = vmatprep.subr.mxu0 0.0
        %503 = vmatpush1.msra.mxu0 %v454
        %504 = vmatprep.subr.mxu0 0.0
        %505 = vmatpush1.msra.mxu0 %v455
        %506 = vmatprep.subr.mxu0 0.0
        %507 = vmatpush1.msra.mxu0 %v456
        %508 = vmatprep.subr.mxu0 0.0
        %509 = vmatpush1.msra.mxu0 %v457
        %510 = vmatprep.subr.mxu0 0.0
        %511 = vmatpush1.msra.mxu0 %v458
        %512 = vmatprep.subr.mxu0 0.0
        %513 = vmatpush1.msra.mxu0 %v459
        %514 = vmatprep.subr.mxu0 0.0
        %515 = vmatpush1.msra.mxu0 %v460
        %516 = vmatprep.subr.mxu0 0.0
        %517 = vmatpush1.msra.mxu0 %v461
        %518 = vmatprep.subr.mxu0 0.0
        %519 = vmatpush1.msra.mxu0 %v462
        %520 = vmatprep.subr.mxu0 0.0
        %521 = vmatpush1.msra.mxu0 %v463
        %522 = vmatprep.subr.mxu0 0.0
        %523 = vmatpush1.msra.mxu0 %v464
        %524 = vmatprep.subr.mxu0 0.0
        %525 = vmatpush1.msra.mxu0 %v465
        %526 = vmatprep.subr.mxu0 0.0
        %527 = vmatpush1.msra.mxu0 %v466
        %528 = vmatprep.subr.mxu0 0.0
        %529 = vmatpush1.msra.mxu0 %v467
        %530 = vmatprep.subr.mxu0 0.0
        %531 = vmatpush1.msra.mxu0 %v468
        %532 = vmatprep.subr.mxu0 0.0
        %533 = vmatpush1.msra.mxu0 %v469
        %534 = vmatprep.mubr.f32.mxu0 %v407
        %535 = vmatmul.mubr.f32.gmra.mrb[0].mxu0 %v406
        %v536 = vpop.f32.mrb[0].mxu0
        %v537 = vadd.f32 0.0, %v536
        %v538 = vpop.f32.mrb[0].mxu0
        %539 = vmatprep.mubr.f32.mxu0 %v409
        %540 = vmatmul.mubr.f32.gmra.mrb[0].mxu0 %v408
        %v541 = vpop.f32.mrb[0].mxu0
        %v542 = vadd.f32 0.0, %v541
        %v543 = vpop.f32.mrb[0].mxu0
        %544 = vmatprep.mubr.f32.mxu0 %v411
        %545 = vmatmul.mubr.f32.gmra.mrb[0].mxu0 %v410
        %v546 = vpop.f32.mrb[0].mxu0
        %v547 = vadd.f32 0.0, %v546
        %v548 = vpop.f32.mrb[0].mxu0
        %549 = vmatprep.mubr.f32.mxu0 %v413
        %550 = vmatmul.mubr.f32.gmra.mrb[0].mxu0 %v412
        %v551 = vpop.f32.mrb[0].mxu0
        %v552 = vadd.f32 0.0, %v551
        %v553 = vpop.f32.mrb[0].mxu0
        %554 = vmatprep.mubr.f32.mxu0 %v415
        %555 = vmatmul.mubr.f32.gmra.mrb[0].mxu0 %v414
        %v556 = vpop.f32.mrb[0].mxu0
        %v557 = vadd.f32 0.0, %v556
        %v558 = vpop.f32.mrb[0].mxu0
        %559 = vmatprep.mubr.f32.mxu0 %v417
        %560 = vmatmul.mubr.f32.gmra.mrb[0].mxu0 %v416
        %v561 = vpop.f32.mrb[0].mxu0
        %v562 = vadd.f32 0.0, %v561
        %v563 = vpop.f32.mrb[0].mxu0
        %564 = vmatprep.mubr.f32.mxu0 %v419
        %565 = vmatmul.mubr.f32.gmra.mrb[0].mxu0 %v418
        %v566 = vpop.f32.mrb[0].mxu0
        %v567 = vadd.f32 0.0, %v566
        %v568 = vpop.f32.mrb[0].mxu0
        %569 = vmatprep.mubr.f32.mxu0 %v421
        %570 = vmatmul.mubr.f32.gmra.mrb[0].mxu0 %v420
        %v571 = vpop.f32.mrb[0].mxu0
        %v572 = vadd.f32 0.0, %v571
        %v573 = vpop.f32.mrb[0].mxu0
        %574 = vmatprep.mubr.f32.mxu0 %v423
        %575 = vmatmul.mubr.f32.gmra.mrb[0].mxu0 %v422
        %v576 = vpop.f32.mrb[0].mxu0
        %v577 = vadd.f32 0.0, %v576
        %v578 = vpop.f32.mrb[0].mxu0
        %579 = vmatprep.mubr.f32.mxu0 %v425
        %580 = vmatmul.mubr.f32.gmra.mrb[0].mxu0 %v424
        %v581 = vpop.f32.mrb[0].mxu0
        %v582 = vadd.f32 0.0, %v581
        %v583 = vpop.f32.mrb[0].mxu0
        %584 = vmatprep.mubr.f32.mxu0 %v427
        %585 = vmatmul.mubr.f32.gmra.mrb[0].mxu0 %v426
        %v586 = vpop.f32.mrb[0].mxu0
        %v587 = vadd.f32 0.0, %v586
        %v588 = vpop.f32.mrb[0].mxu0
        %589 = vmatprep.mubr.f32.mxu0 %v429
        %590 = vmatmul.mubr.f32.gmra.mrb[0].mxu0 %v428
        %v591 = vpop.f32.mrb[0].mxu0
        %v592 = vadd.f32 0.0, %v591
        %v593 = vpop.f32.mrb[0].mxu0
        %594 = vmatprep.mubr.f32.mxu0 %v431
        %595 = vmatmul.mubr.f32.gmra.mrb[0].mxu0 %v430
        %v596 = vpop.f32.mrb[0].mxu0
        %v597 = vadd.f32 0.0, %v596
        %v598 = vpop.f32.mrb[0].mxu0
        %599 = vmatprep.mubr.f32.mxu0 %v433
        %600 = vmatmul.mubr.f32.gmra.mrb[0].mxu0 %v432
        %v601 = vpop.f32.mrb[0].mxu0
        %v602 = vadd.f32 0.0, %v601
        %v603 = vpop.f32.mrb[0].mxu0
        %604 = vmatprep.mubr.f32.mxu0 %v435
        %605 = vmatmul.mubr.f32.gmra.mrb[0].mxu0 %v434
        %v606 = vpop.f32.mrb[0].mxu0
        %v607 = vadd.f32 0.0, %v606
        %v608 = vpop.f32.mrb[0].mxu0
        %609 = vmatprep.mubr.f32.mxu0 %v437
        %610 = vmatmul.mubr.f32.gmra.mrb[0].mxu0 %v436
        %v611 = vpop.f32.mrb[0].mxu0
        %v612 = vadd.f32 0.0, %v611
        %v613 = vpop.f32.mrb[0].mxu0
        %614 = vdwg.mxu0
        %v615 = vld [vmem:[#allocation8] sm:$0xff]
        %v616 = vld [vmem:[#allocation8 + $0x8] sm:$0xff]
        %v617 = vld [vmem:[%s349] sm:$0xff]
        %v618 = vld [vmem:[%s349 + $0x8] sm:$0xff]
        %v619 = vld [vmem:[%s349 + $0x10] sm:$0xff]
        %v620 = vld [vmem:[%s349 + $0x18] sm:$0xff]
        %v621 = vld [vmem:[%s349 + $0x20] sm:$0xff]
        %v622 = vld [vmem:[%s349 + $0x28] sm:$0xff]
        %v623 = vld [vmem:[%s349 + $0x30] sm:$0xff]
        %v624 = vld [vmem:[%s349 + $0x38] sm:$0xff]
        %v625 = vld [vmem:[%s349 + $0x40] sm:$0xff]
        %v626 = vld [vmem:[%s349 + $0x48] sm:$0xff]
        %v627 = vld [vmem:[%s349 + $0x50] sm:$0xff]
        %v628 = vld [vmem:[%s349 + $0x58] sm:$0xff]
        %v629 = vld [vmem:[%s349 + $0x60] sm:$0xff]
        %v630 = vld [vmem:[%s349 + $0x68] sm:$0xff]
        %v631 = vld [vmem:[%s349 + $0x70] sm:$0xff]
        %v632 = vld [vmem:[%s349 + $0x78] sm:$0xff]
        %v633 = vld [vmem:[#allocation9] sm:$0xff]
        %v634 = vld [vmem:[#allocation9 + $0x8] sm:$0xff]
        %vm635 = vcmask 130048
        %v637 = vsel %vm635, %v617, 0
        %v640 = vsel %vm635, %v618, 0
        %v643 = vsel %vm635, %v619, 0
        %v646 = vsel %vm635, %v620, 0
        %v649 = vsel %vm635, %v621, 0
        %v652 = vsel %vm635, %v622, 0
        %v655 = vsel %vm635, %v623, 0
        %v658 = vsel %vm635, %v624, 0
        %v661 = vsel %vm635, %v625, 0
        %v664 = vsel %vm635, %v626, 0
        %v667 = vsel %vm635, %v627, 0
        %v670 = vsel %vm635, %v628, 0
        %v673 = vsel %vm635, %v629, 0
        %v676 = vsel %vm635, %v630, 0
        %v679 = vsel %vm635, %v631, 0
        %v682 = vsel %vm635, %v632, 0
        %684 = vmatprep.subr.mxu0 0.0
        %685 = vmatpush1.msra.mxu0 %v633
        %686 = vmatprep.subr.mxu0 0.0
        %687 = vmatpush1.msra.mxu0 %v634
        %688 = vmatprep.subr.mxu0 0.0
        %689 = vmatpush1.msra.mxu0 0.0
        %690 = vmatprep.subr.mxu0 0.0
        %691 = vmatpush1.msra.mxu0 0.0
        %692 = vmatprep.subr.mxu0 0.0
        %693 = vmatpush1.msra.mxu0 0.0
        %694 = vmatprep.subr.mxu0 0.0
        %695 = vmatpush1.msra.mxu0 0.0
        %696 = vmatprep.subr.mxu0 0.0
        %697 = vmatpush1.msra.mxu0 0.0
        %698 = vmatprep.subr.mxu0 0.0
        %699 = vmatpush1.msra.mxu0 0.0
        %700 = vmatprep.subr.mxu0 0.0
        %701 = vmatpush1.msra.mxu0 0.0
        %702 = vmatprep.subr.mxu0 0.0
        %703 = vmatpush1.msra.mxu0 0.0
        %704 = vmatprep.subr.mxu0 0.0
        %705 = vmatpush1.msra.mxu0 0.0
        %706 = vmatprep.subr.mxu0 0.0
        %707 = vmatpush1.msra.mxu0 0.0
        %708 = vmatprep.subr.mxu0 0.0
        %709 = vmatpush1.msra.mxu0 0.0
        %710 = vmatprep.subr.mxu0 0.0
        %711 = vmatpush1.msra.mxu0 0.0
        %712 = vmatprep.subr.mxu0 0.0
        %713 = vmatpush1.msra.mxu0 0.0
        %714 = vmatprep.subr.mxu0 0.0
        %715 = vmatpush1.msra.mxu0 0.0
        %716 = vmatprep.subr.mxu0 0.0
        %717 = vmatpush1.msra.mxu0 0.0
        %718 = vmatprep.subr.mxu0 0.0
        %719 = vmatpush1.msra.mxu0 0.0
        %720 = vmatprep.subr.mxu0 0.0
        %721 = vmatpush1.msra.mxu0 0.0
        %722 = vmatprep.subr.mxu0 0.0
        %723 = vmatpush1.msra.mxu0 0.0
        %724 = vmatprep.subr.mxu0 0.0
        %725 = vmatpush1.msra.mxu0 0.0
        %726 = vmatprep.subr.mxu0 0.0
        %727 = vmatpush1.msra.mxu0 0.0
        %728 = vmatprep.subr.mxu0 0.0
        %729 = vmatpush1.msra.mxu0 0.0
        %730 = vmatprep.subr.mxu0 0.0
        %731 = vmatpush1.msra.mxu0 0.0
        %732 = vmatprep.subr.mxu0 0.0
        %733 = vmatpush1.msra.mxu0 0.0
        %734 = vmatprep.subr.mxu0 0.0
        %735 = vmatpush1.msra.mxu0 0.0
        %736 = vmatprep.subr.mxu0 0.0
        %737 = vmatpush1.msra.mxu0 0.0
        %738 = vmatprep.subr.mxu0 0.0
        %739 = vmatpush1.msra.mxu0 0.0
        %740 = vmatprep.subr.mxu0 0.0
        %741 = vmatpush1.msra.mxu0 0.0
        %742 = vmatprep.subr.mxu0 0.0
        %743 = vmatpush1.msra.mxu0 0.0
        %744 = vmatprep.subr.mxu0 0.0
        %745 = vmatpush1.msra.mxu0 0.0
        %746 = vmatprep.subr.mxu0 0.0
        %747 = vmatpush1.msra.mxu0 0.0
        %748 = vmatprep.mubr.f32.mxu0 0.0
        %749 = vmatmul.mubr.f32.gmra.mrb[0].mxu0 %v637
        %v750 = vpop.f32.mrb[0].mxu0
        %v751 = vadd.f32 0.0, %v750
        %v752 = vpop.f32.mrb[0].mxu0
        %753 = vmatprep.mubr.f32.mxu0 0.0
        %754 = vmatmul.mubr.f32.gmra.mrb[0].mxu0 %v640
        %v755 = vpop.f32.mrb[0].mxu0
        %v756 = vadd.f32 0.0, %v755
        %v757 = vpop.f32.mrb[0].mxu0
        %758 = vmatprep.mubr.f32.mxu0 0.0
        %759 = vmatmul.mubr.f32.gmra.mrb[0].mxu0 %v643
        %v760 = vpop.f32.mrb[0].mxu0
        %v761 = vadd.f32 0.0, %v760
        %v762 = vpop.f32.mrb[0].mxu0
        %763 = vmatprep.mubr.f32.mxu0 0.0
        %764 = vmatmul.mubr.f32.gmra.mrb[0].mxu0 %v646
        %v765 = vpop.f32.mrb[0].mxu0
        %v766 = vadd.f32 0.0, %v765
        %v767 = vpop.f32.mrb[0].mxu0
        %768 = vmatprep.mubr.f32.mxu0 0.0
        %769 = vmatmul.mubr.f32.gmra.mrb[0].mxu0 %v649
        %v770 = vpop.f32.mrb[0].mxu0
        %v771 = vadd.f32 0.0, %v770
        %v772 = vpop.f32.mrb[0].mxu0
        %773 = vmatprep.mubr.f32.mxu0 0.0
        %774 = vmatmul.mubr.f32.gmra.mrb[0].mxu0 %v652
        %v775 = vpop.f32.mrb[0].mxu0
        %v776 = vadd.f32 0.0, %v775
        %v777 = vpop.f32.mrb[0].mxu0
        %778 = vmatprep.mubr.f32.mxu0 0.0
        %779 = vmatmul.mubr.f32.gmra.mrb[0].mxu0 %v655
        %v780 = vpop.f32.mrb[0].mxu0
        %v781 = vadd.f32 0.0, %v780
        %v782 = vpop.f32.mrb[0].mxu0
        %783 = vmatprep.mubr.f32.mxu0 0.0
        %784 = vmatmul.mubr.f32.gmra.mrb[0].mxu0 %v658
        %v785 = vpop.f32.mrb[0].mxu0
        %v786 = vadd.f32 0.0, %v785
        %v787 = vpop.f32.mrb[0].mxu0
        %788 = vmatprep.mubr.f32.mxu0 0.0
        %789 = vmatmul.mubr.f32.gmra.mrb[0].mxu0 %v661
        %v790 = vpop.f32.mrb[0].mxu0
        %v791 = vadd.f32 0.0, %v790
        %v792 = vpop.f32.mrb[0].mxu0
        %793 = vmatprep.mubr.f32.mxu0 0.0
        %794 = vmatmul.mubr.f32.gmra.mrb[0].mxu0 %v664
        %v795 = vpop.f32.mrb[0].mxu0
        %v796 = vadd.f32 0.0, %v795
        %v797 = vpop.f32.mrb[0].mxu0
        %798 = vmatprep.mubr.f32.mxu0 0.0
        %799 = vmatmul.mubr.f32.gmra.mrb[0].mxu0 %v667
        %v800 = vpop.f32.mrb[0].mxu0
        %v801 = vadd.f32 0.0, %v800
        %v802 = vpop.f32.mrb[0].mxu0
        %803 = vmatprep.mubr.f32.mxu0 0.0
        %804 = vmatmul.mubr.f32.gmra.mrb[0].mxu0 %v670
        %v805 = vpop.f32.mrb[0].mxu0
        %v806 = vadd.f32 0.0, %v805
        %v807 = vpop.f32.mrb[0].mxu0
        %808 = vmatprep.mubr.f32.mxu0 0.0
        %809 = vmatmul.mubr.f32.gmra.mrb[0].mxu0 %v673
        %v810 = vpop.f32.mrb[0].mxu0
        %v811 = vadd.f32 0.0, %v810
        %v812 = vpop.f32.mrb[0].mxu0
        %813 = vmatprep.mubr.f32.mxu0 0.0
        %814 = vmatmul.mubr.f32.gmra.mrb[0].mxu0 %v676
        %v815 = vpop.f32.mrb[0].mxu0
        %v816 = vadd.f32 0.0, %v815
        %v817 = vpop.f32.mrb[0].mxu0
        %818 = vmatprep.mubr.f32.mxu0 0.0
        %819 = vmatmul.mubr.f32.gmra.mrb[0].mxu0 %v679
        %v820 = vpop.f32.mrb[0].mxu0
        %v821 = vadd.f32 0.0, %v820
        %v822 = vpop.f32.mrb[0].mxu0
        %823 = vmatprep.mubr.f32.mxu0 0.0
        %824 = vmatmul.mubr.f32.gmra.mrb[0].mxu0 %v682
        %v825 = vpop.f32.mrb[0].mxu0
        %v826 = vadd.f32 0.0, %v825
        %v827 = vpop.f32.mrb[0].mxu0
        %828 = vdwg.mxu0
        %v830 = vsel %vm635, %v537, 0
        %v833 = vsel %vm635, %v542, 0
        %v836 = vsel %vm635, %v547, 0
        %v839 = vsel %vm635, %v552, 0
        %v842 = vsel %vm635, %v557, 0
        %v845 = vsel %vm635, %v562, 0
        %v848 = vsel %vm635, %v567, 0
        %v851 = vsel %vm635, %v572, 0
        %v854 = vsel %vm635, %v577, 0
        %v857 = vsel %vm635, %v582, 0
        %v860 = vsel %vm635, %v587, 0
        %v863 = vsel %vm635, %v592, 0
        %v866 = vsel %vm635, %v597, 0
        %v869 = vsel %vm635, %v602, 0
        %v872 = vsel %vm635, %v607, 0
        %v875 = vsel %vm635, %v612, 0
        %877 = vmatprep.subr.mxu0 0.0
        %878 = vmatpush1.msra.mxu0 %v615
        %879 = vmatprep.subr.mxu0 0.0
        %880 = vmatpush1.msra.mxu0 %v616
        %881 = vmatprep.subr.mxu0 0.0
        %882 = vmatpush1.msra.mxu0 0.0
        %883 = vmatprep.subr.mxu0 0.0
        %884 = vmatpush1.msra.mxu0 0.0
        %885 = vmatprep.subr.mxu0 0.0
        %886 = vmatpush1.msra.mxu0 0.0
        %887 = vmatprep.subr.mxu0 0.0
        %888 = vmatpush1.msra.mxu0 0.0
        %889 = vmatprep.subr.mxu0 0.0
        %890 = vmatpush1.msra.mxu0 0.0
        %891 = vmatprep.subr.mxu0 0.0
        %892 = vmatpush1.msra.mxu0 0.0
        %893 = vmatprep.subr.mxu0 0.0
        %894 = vmatpush1.msra.mxu0 0.0
        %895 = vmatprep.subr.mxu0 0.0
        %896 = vmatpush1.msra.mxu0 0.0
        %897 = vmatprep.subr.mxu0 0.0
        %898 = vmatpush1.msra.mxu0 0.0
        %899 = vmatprep.subr.mxu0 0.0
        %900 = vmatpush1.msra.mxu0 0.0
        %901 = vmatprep.subr.mxu0 0.0
        %902 = vmatpush1.msra.mxu0 0.0
        %903 = vmatprep.subr.mxu0 0.0
        %904 = vmatpush1.msra.mxu0 0.0
        %905 = vmatprep.subr.mxu0 0.0
        %906 = vmatpush1.msra.mxu0 0.0
        %907 = vmatprep.subr.mxu0 0.0
        %908 = vmatpush1.msra.mxu0 0.0
        %909 = vmatprep.subr.mxu0 0.0
        %910 = vmatpush1.msra.mxu0 0.0
        %911 = vmatprep.subr.mxu0 0.0
        %912 = vmatpush1.msra.mxu0 0.0
        %913 = vmatprep.subr.mxu0 0.0
        %914 = vmatpush1.msra.mxu0 0.0
        %915 = vmatprep.subr.mxu0 0.0
        %916 = vmatpush1.msra.mxu0 0.0
        %917 = vmatprep.subr.mxu0 0.0
        %918 = vmatpush1.msra.mxu0 0.0
        %919 = vmatprep.subr.mxu0 0.0
        %920 = vmatpush1.msra.mxu0 0.0
        %921 = vmatprep.subr.mxu0 0.0
        %922 = vmatpush1.msra.mxu0 0.0
        %923 = vmatprep.subr.mxu0 0.0
        %924 = vmatpush1.msra.mxu0 0.0
        %925 = vmatprep.subr.mxu0 0.0
        %926 = vmatpush1.msra.mxu0 0.0
        %927 = vmatprep.subr.mxu0 0.0
        %928 = vmatpush1.msra.mxu0 0.0
        %929 = vmatprep.subr.mxu0 0.0
        %930 = vmatpush1.msra.mxu0 0.0
        %931 = vmatprep.subr.mxu0 0.0
        %932 = vmatpush1.msra.mxu0 0.0
        %933 = vmatprep.subr.mxu0 0.0
        %934 = vmatpush1.msra.mxu0 0.0
        %935 = vmatprep.subr.mxu0 0.0
        %936 = vmatpush1.msra.mxu0 0.0
        %937 = vmatprep.subr.mxu0 0.0
        %938 = vmatpush1.msra.mxu0 0.0
        %939 = vmatprep.subr.mxu0 0.0
        %940 = vmatpush1.msra.mxu0 0.0
        %941 = vmatprep.mubr.f32.mxu0 0.0
        %942 = vmatmul.mubr.f32.gmra.mrb[0].mxu0 %v830
        %v943 = vpop.f32.mrb[0].mxu0
        %v944 = vadd.f32 %v751, %v943
        %v945 = vpop.f32.mrb[0].mxu0
        %946 = vmatprep.mubr.f32.mxu0 0.0
        %947 = vmatmul.mubr.f32.gmra.mrb[0].mxu0 %v833
        %v948 = vpop.f32.mrb[0].mxu0
        %v949 = vadd.f32 %v756, %v948
        %v950 = vpop.f32.mrb[0].mxu0
        %951 = vmatprep.mubr.f32.mxu0 0.0
        %952 = vmatmul.mubr.f32.gmra.mrb[0].mxu0 %v836
        %v953 = vpop.f32.mrb[0].mxu0
        %v954 = vadd.f32 %v761, %v953
        %v955 = vpop.f32.mrb[0].mxu0
        %956 = vmatprep.mubr.f32.mxu0 0.0
        %957 = vmatmul.mubr.f32.gmra.mrb[0].mxu0 %v839
        %v958 = vpop.f32.mrb[0].mxu0
        %v959 = vadd.f32 %v766, %v958
        %v960 = vpop.f32.mrb[0].mxu0
        %961 = vmatprep.mubr.f32.mxu0 0.0
        %962 = vmatmul.mubr.f32.gmra.mrb[0].mxu0 %v842
        %v963 = vpop.f32.mrb[0].mxu0
        %v964 = vadd.f32 %v771, %v963
        %v965 = vpop.f32.mrb[0].mxu0
        %966 = vmatprep.mubr.f32.mxu0 0.0
        %967 = vmatmul.mubr.f32.gmra.mrb[0].mxu0 %v845
        %v968 = vpop.f32.mrb[0].mxu0
        %v969 = vadd.f32 %v776, %v968
        %v970 = vpop.f32.mrb[0].mxu0
        %971 = vmatprep.mubr.f32.mxu0 0.0
        %972 = vmatmul.mubr.f32.gmra.mrb[0].mxu0 %v848
        %v973 = vpop.f32.mrb[0].mxu0
        %v974 = vadd.f32 %v781, %v973
        %v975 = vpop.f32.mrb[0].mxu0
        %976 = vmatprep.mubr.f32.mxu0 0.0
        %977 = vmatmul.mubr.f32.gmra.mrb[0].mxu0 %v851
        %v978 = vpop.f32.mrb[0].mxu0
        %v979 = vadd.f32 %v786, %v978
        %v980 = vpop.f32.mrb[0].mxu0
        %981 = vmatprep.mubr.f32.mxu0 0.0
        %982 = vmatmul.mubr.f32.gmra.mrb[0].mxu0 %v854
        %v983 = vpop.f32.mrb[0].mxu0
        %v984 = vadd.f32 %v791, %v983
        %v985 = vpop.f32.mrb[0].mxu0
        %986 = vmatprep.mubr.f32.mxu0 0.0
        %987 = vmatmul.mubr.f32.gmra.mrb[0].mxu0 %v857
        %v988 = vpop.f32.mrb[0].mxu0
        %v989 = vadd.f32 %v796, %v988
        %v990 = vpop.f32.mrb[0].mxu0
        %991 = vmatprep.mubr.f32.mxu0 0.0
        %992 = vmatmul.mubr.f32.gmra.mrb[0].mxu0 %v860
        %v993 = vpop.f32.mrb[0].mxu0
        %v994 = vadd.f32 %v801, %v993
        %v995 = vpop.f32.mrb[0].mxu0
        %996 = vmatprep.mubr.f32.mxu0 0.0
        %997 = vmatmul.mubr.f32.gmra.mrb[0].mxu0 %v863
        %v998 = vpop.f32.mrb[0].mxu0
        %v999 = vadd.f32 %v806, %v998
        %v1000 = vpop.f32.mrb[0].mxu0
        %1001 = vmatprep.mubr.f32.mxu0 0.0
        %1002 = vmatmul.mubr.f32.gmra.mrb[0].mxu0 %v866
        %v1003 = vpop.f32.mrb[0].mxu0
        %v1004 = vadd.f32 %v811, %v1003
        %v1005 = vpop.f32.mrb[0].mxu0
        %1006 = vmatprep.mubr.f32.mxu0 0.0
        %1007 = vmatmul.mubr.f32.gmra.mrb[0].mxu0 %v869
        %v1008 = vpop.f32.mrb[0].mxu0
        %v1009 = vadd.f32 %v816, %v1008
        %v1010 = vpop.f32.mrb[0].mxu0
        %1011 = vmatprep.mubr.f32.mxu0 0.0
        %1012 = vmatmul.mubr.f32.gmra.mrb[0].mxu0 %v872
        %v1013 = vpop.f32.mrb[0].mxu0
        %v1014 = vadd.f32 %v821, %v1013
        %v1015 = vpop.f32.mrb[0].mxu0
        %1016 = vmatprep.mubr.f32.mxu0 0.0
        %1017 = vmatmul.mubr.f32.gmra.mrb[0].mxu0 %v875
        %v1018 = vpop.f32.mrb[0].mxu0
        %v1019 = vadd.f32 %v826, %v1018
        %v1020 = vpop.f32.mrb[0].mxu0
        %1021 = vdwg.mxu0
        %v1022 = vld [vmem:[#allocation11] sm:$0x1]
        %v1024 = vlaneseq
        %v1025 = vshrl.u32 %v1024, 7
        %v1026 = vsub.s32 0, %v1025
        %v1027 = vrot.slane %v1022, %v1026
        %v1029 = vadd.f32 %v944, %v1027
        %v1030 = vadd.f32 %v949, %v1027
        %v1031 = vadd.f32 %v954, %v1027
        %v1032 = vadd.f32 %v959, %v1027
        %v1033 = vadd.f32 %v964, %v1027
        %v1034 = vadd.f32 %v969, %v1027
        %v1035 = vadd.f32 %v974, %v1027
        %v1036 = vadd.f32 %v979, %v1027
        %v1037 = vadd.f32 %v984, %v1027
        %v1038 = vadd.f32 %v989, %v1027
        %v1039 = vadd.f32 %v994, %v1027
        %v1040 = vadd.f32 %v999, %v1027
        %v1041 = vadd.f32 %v1004, %v1027
        %v1042 = vadd.f32 %v1009, %v1027
        %v1043 = vadd.f32 %v1014, %v1027
        %v1044 = vadd.f32 %v1019, %v1027
        %1045 = vst.msk [vmem:[%s394] sm:$0xff] %vm635, %v1029
        %1046 = vst.msk [vmem:[%s394 + $0x8] sm:$0xff] %vm635, %v1030
        %1047 = vst.msk [vmem:[%s394 + $0x10] sm:$0xff] %vm635, %v1031
        %1048 = vst.msk [vmem:[%s394 + $0x18] sm:$0xff] %vm635, %v1032
        %1049 = vst.msk [vmem:[%s394 + $0x20] sm:$0xff] %vm635, %v1033
        %1050 = vst.msk [vmem:[%s394 + $0x28] sm:$0xff] %vm635, %v1034
        %1051 = vst.msk [vmem:[%s394 + $0x30] sm:$0xff] %vm635, %v1035
        %1052 = vst.msk [vmem:[%s394 + $0x38] sm:$0xff] %vm635, %v1036
        %1053 = vst.msk [vmem:[%s394 + $0x40] sm:$0xff] %vm635, %v1037
        %1054 = vst.msk [vmem:[%s394 + $0x48] sm:$0xff] %vm635, %v1038
        %1055 = vst.msk [vmem:[%s394 + $0x50] sm:$0xff] %vm635, %v1039
        %1056 = vst.msk [vmem:[%s394 + $0x58] sm:$0xff] %vm635, %v1040
        %1057 = vst.msk [vmem:[%s394 + $0x60] sm:$0xff] %vm635, %v1041
        %1058 = vst.msk [vmem:[%s394 + $0x68] sm:$0xff] %vm635, %v1042
        %1059 = vst.msk [vmem:[%s394 + $0x70] sm:$0xff] %vm635, %v1043
        %1060 = vst.msk [vmem:[%s394 + $0x78] sm:$0xff] %vm635, %v1044
        %v1061 = vpack.c.bf16 %v1030, %v1029
        %v1062 = vpack.c.bf16 %v1032, %v1031
        %v1063 = vpack.c.bf16 %v1034, %v1033
        %v1064 = vpack.c.bf16 %v1036, %v1035
        %v1065 = vpack.c.bf16 %v1038, %v1037
        %v1066 = vpack.c.bf16 %v1040, %v1039
        %v1067 = vpack.c.bf16 %v1042, %v1041
        %v1068 = vpack.c.bf16 %v1044, %v1043
        %v1077 = vunpack.c.l.b16 %v1061
        %v1078 = vunpack.c.h.b16 %v1061
        %v1079 = vunpack.c.l.b16 %v1062
        %v1080 = vunpack.c.h.b16 %v1062
        %v1081 = vunpack.c.l.b16 %v1063
        %v1082 = vunpack.c.h.b16 %v1063
        %v1083 = vunpack.c.l.b16 %v1064
        %v1084 = vunpack.c.h.b16 %v1064
        %v1085 = vunpack.c.l.b16 %v1065
        %v1086 = vunpack.c.h.b16 %v1065
        %v1087 = vunpack.c.l.b16 %v1066
        %v1088 = vunpack.c.h.b16 %v1066
        %v1089 = vunpack.c.l.b16 %v1067
        %v1090 = vunpack.c.h.b16 %v1067
        %v1091 = vunpack.c.l.b16 %v1068
        %v1092 = vunpack.c.h.b16 %v1068
        %v1093 = vpack.c.b16 %v1077, %v1077
        %v1094 = vpack.c.b16 %v1078, %v1078
        %v1095 = vpack.c.b16 %v1079, %v1079
        %v1096 = vpack.c.b16 %v1080, %v1080
        %v1097 = vpack.c.b16 %v1081, %v1081
        %v1098 = vpack.c.b16 %v1082, %v1082
        %v1099 = vpack.c.b16 %v1083, %v1083
        %v1100 = vpack.c.b16 %v1084, %v1084
        %v1101 = vpack.c.b16 %v1085, %v1085
        %v1102 = vpack.c.b16 %v1086, %v1086
        %v1103 = vpack.c.b16 %v1087, %v1087
        %v1104 = vpack.c.b16 %v1088, %v1088
        %v1105 = vpack.c.b16 %v1089, %v1089
        %v1106 = vpack.c.b16 %v1090, %v1090
        %v1107 = vpack.c.b16 %v1091, %v1091
        %v1108 = vpack.c.b16 %v1092, %v1092
        %vm1125 = vcmask 125952
        %1126 = vst.msk [vmem:[%s401] sm:$0xf] %vm1125, %v1093
        %1127 = vst.msk [vmem:[%s401 + $0x4] sm:$0xf] %vm1125, %v1094
        %1128 = vst.msk [vmem:[%s401 + $0x8] sm:$0xf] %vm1125, %v1095
        %1129 = vst.msk [vmem:[%s401 + $0xc] sm:$0xf] %vm1125, %v1096
        %1130 = vst.msk [vmem:[%s401 + $0x10] sm:$0xf] %vm1125, %v1097
        %1131 = vst.msk [vmem:[%s401 + $0x14] sm:$0xf] %vm1125, %v1098
        %1132 = vst.msk [vmem:[%s401 + $0x18] sm:$0xf] %vm1125, %v1099
        %1133 = vst.msk [vmem:[%s401 + $0x1c] sm:$0xf] %vm1125, %v1100
        %1134 = vst.msk [vmem:[%s401 + $0x20] sm:$0xf] %vm1125, %v1101
        %1135 = vst.msk [vmem:[%s401 + $0x24] sm:$0xf] %vm1125, %v1102
        %1136 = vst.msk [vmem:[%s401 + $0x28] sm:$0xf] %vm1125, %v1103
        %1137 = vst.msk [vmem:[%s401 + $0x2c] sm:$0xf] %vm1125, %v1104
        %1138 = vst.msk [vmem:[%s401 + $0x30] sm:$0xf] %vm1125, %v1105
        %1139 = vst.msk [vmem:[%s401 + $0x34] sm:$0xf] %vm1125, %v1106
        %1140 = vst.msk [vmem:[%s401 + $0x38] sm:$0xf] %vm1125, %v1107
        %1141 = vst.msk [vmem:[%s401 + $0x3c] sm:$0xf] %vm1125, %v1108
        %s1142 = sand.u32 %s174, 1
        %s1143 = scalar_lea.sflag [#allocation4], %s1142
        %s1144 = sand.u32 %s174, 1
        %s1145 = smul.addr %s1144, 128
        %s1146 = scalar_lea.vmem [#allocation12], %s1145
        %s1147 = sand.u32 %s200, 1
        %s1148 = scalar_lea.sflag [#allocation14], %s1147
        %s1149 = sand.u32 %s200, 1
        %s1150 = smul.addr %s1149, 64
        %s1151 = scalar_lea.vmem [#allocation13], %s1150
        // Predicated region
        $region69: #{tpu_custom_call.1} parent=43 // pred_check
          %p1152 = pneg %p184
        $region70: #{tpu_custom_call.1} parent=43 // pred_check_branch
          %1154 = sbr.rel (%p1152) target = $region72
        $region71: #{tpu_custom_call.1} parent=43 // pred_region
          %s1155 = smul.u32 16, %s30
          %s1157 = ssub.s32 2048, 2048
          %1158 = vsyncadd %s1143, %s1157
          %s1159 = smul.addr %s1155, 128
          %s1160 = scalar_lea.hbm %s6, %s1159
          %s1161 = sshll.u32 %s1146, 4
          %s1162 = int_to_ptr.vmem [resolvable:$true] %s1161
          %1167 = dma.vmem_to_hbm [thread:$0]  %s1162, 2048, %s1160, %s1143, 128, 128, 8
        $region72: #{tpu_custom_call.1} parent=43 // pred_fallthru
          _
        // Predicated region
        $region73: #{tpu_custom_call.1} parent=43 // pred_check
          %p1168 = pneg %p210
        $region74: #{tpu_custom_call.1} parent=43 // pred_check_branch
          %1170 = sbr.rel (%p1168) target = $region76
        $region75: #{tpu_custom_call.1} parent=43 // pred_region
          %s1171 = smul.u32 16, %s30
          %s1173 = ssub.s32 1024, 1024
          %1174 = vsyncadd %s1148, %s1173
          %s1175 = smul.addr %s1171, 64
          %s1176 = scalar_lea.hbm %s7, %s1175
          %s1177 = sshll.u32 %s1151, 4
          %s1178 = int_to_ptr.vmem [resolvable:$true] %s1177
          %1183 = dma.vmem_to_hbm [thread:$0]  %s1178, 1024, %s1176, %s1148, 64, 64, 4
        $region76: #{tpu_custom_call.1} parent=43 // pred_fallthru
          _
      $region44: #{tpu_custom_call.1} parent=5 // pred_fallthru
        _
      %p1184 = scmp.le.s32.totalorder 2, %s25
      // Predicated region
      $region77: #{tpu_custom_call.1} parent=5 // pred_check
        %p1185 = pneg %p1184
      $region78: #{tpu_custom_call.1} parent=5 // pred_check_branch
        %1187 = sbr.rel (%p1185) target = $region80
      $region79: #{tpu_custom_call.1} parent=5 // pred_region
        %s1188 = ssub.s32 %s25, 2
        // Predicated region
        $region81: #{tpu_custom_call.1} parent=79 // pred_check
          %p1189 = pneg %p190
        $region82: #{tpu_custom_call.1} parent=79 // pred_check_branch
          %1191 = sbr.rel (%p1189) target = $region84
        $region83: #{tpu_custom_call.1} parent=79 // pred_region
          %s1192 = sand.u32 %s175, 1
          %s1193 = scalar_lea.sflag [#allocation4], %s1192
          %s1194 = sand.u32 %s175, 1
          %s1195 = smul.addr %s1194, 128
          %s1196 = scalar_lea.vmem [#allocation12], %s1195
          %1197 = dma.done %s1193, 2048
        $region84: #{tpu_custom_call.1} parent=79 // pred_fallthru
          _
        // Predicated region
        $region85: #{tpu_custom_call.1} parent=79 // pred_check
          %p1198 = pneg %p216
        $region86: #{tpu_custom_call.1} parent=79 // pred_check_branch
          %1200 = sbr.rel (%p1198) target = $region88
        $region87: #{tpu_custom_call.1} parent=79 // pred_region
          %s1201 = sand.u32 %s201, 1
          %s1202 = scalar_lea.sflag [#allocation14], %s1201
          %s1203 = sand.u32 %s201, 1
          %s1204 = smul.addr %s1203, 64
          %s1205 = scalar_lea.vmem [#allocation13], %s1204
          %1206 = dma.done %s1202, 1024
        $region88: #{tpu_custom_call.1} parent=79 // pred_fallthru
          _
      $region80: #{tpu_custom_call.1} parent=5 // pred_fallthru
        _
    $region6: #{tpu_custom_call.1} parent=1 // loop_footer
      %s29 = sadd.s32 1, %s25
    $region7: #{tpu_custom_call.1} parent=1 // loop_footer_branch
      %24 = sbr.rel target = $region3
    $region8: #{tpu_custom_call.1} parent=1 // loop_exit
      _
    %1207 = vsyncpa [#allocation3], 1
    %s1208 = scalar_lea.sflag [#allocation3], 1
    %1209 = vsyncpa %s1208, 1
    %1210 = vsyncpa [#allocation6], 1
    %1211 = vsyncpa [#allocation10], 1
    %1212 = vsyncpa [#allocation4], 1
    %s1213 = scalar_lea.sflag [#allocation4], 1
    %1214 = vsyncpa %s1213, 1
    %1215 = vsyncpa [#allocation14], 1
    %s1216 = scalar_lea.sflag [#allocation14], 1
    %1217 = vsyncpa %s1216, 1

</llo_original>
